<compile_context>
chip_gen: v7x
topology: tpu7x:2x2x1
jax: 0.10.0
libtpu: 0.0.40
codegen_flags: <defaults>
</compile_context>

<pallas_src>
import jax
import jax.numpy as jnp
import numpy as np
from jax.experimental import pallas as pl
from jax.experimental.pallas import tpu as pltpu

_LANES = 128
_SUBLANES = 8
_MAX_TILE_ROWS = 1024   # (1024, 128) f32 = 512 KiB/buffer -> far under the VMEM budget


def _v_update_kernel(rho2_ref, v_ref, y_ref, o_ref):
    rho2 = rho2_ref[0]                 # scalar read from SMEM
    inv = 1.0 / (1.0 + rho2)           # scalar-unit divide, once per grid step
    o_ref[...] = (v_ref[...] * rho2 + y_ref[...]) * inv


def v_update_gaussian(v_tilde, y, rho2):
    """(rho2 * v_tilde + y) / (1 + rho2), computed in float32."""
    v = jnp.asarray(v_tilde, jnp.float32)
    yv = jnp.asarray(y, jnp.float32)
    if v.shape != yv.shape:
        v, yv = jnp.broadcast_arrays(v, yv)
    orig_shape = v.shape
    total = int(np.prod(orig_shape)) if len(orig_shape) else 1

    # Lane-dense 2-D view: (rows, 128) with rows a multiple of 8 so every
    # vector store is an unmasked full-vreg vst.
    nrows = pl.cdiv(total, _LANES)
    nrows = ((nrows + _SUBLANES - 1) // _SUBLANES) * _SUBLANES
    tile_rows = min(nrows, _MAX_TILE_ROWS)
    nsteps = pl.cdiv(nrows, tile_rows)
    nrows_p = nsteps * tile_rows
    pad = nrows_p * _LANES - total

    vf = v.reshape(-1)
    yf = yv.reshape(-1)
    if pad:
        vf = jnp.pad(vf, (0, pad))
        yf = jnp.pad(yf, (0, pad))
    v2 = vf.reshape(nrows_p, _LANES)
    y2 = yf.reshape(nrows_p, _LANES)
    rho = jnp.asarray(rho2, jnp.float32).reshape(1)

    out = pl.pallas_call(
        _v_update_kernel,
        out_shape=jax.ShapeDtypeStruct((nrows_p, _LANES), jnp.float32),
        grid=(nsteps,),
        in_specs=[
            pl.BlockSpec(memory_space=pltpu.MemorySpace.SMEM),       # rho2 scalar
            pl.BlockSpec((tile_rows, _LANES), lambda i: (i, 0)),     # v_tilde tile
            pl.BlockSpec((tile_rows, _LANES), lambda i: (i, 0)),     # y tile
        ],
        out_specs=pl.BlockSpec((tile_rows, _LANES), lambda i: (i, 0)),
        compiler_params=pltpu.CompilerParams(
            dimension_semantics=("parallel",)),
    )(rho, v2, y2)

    return out.reshape(-1)[:total].reshape(orig_shape)


if __name__ == "__main__":
    key = jax.random.PRNGKey(0)
    kv, ky = jax.random.split(key)

    # Small shapes consistent with the module's usage (batched images).
    v_tilde = jax.random.normal(kv, (2, 4, 16, 16), jnp.float32)
    y = jax.random.normal(ky, (2, 4, 16, 16), jnp.float32)
    rho2 = jnp.float32(0.35)

    fwd = jax.jit(v_update_gaussian)
    out = jax.block_until_ready(fwd(v_tilde, y, rho2))

    ref = (rho2 * v_tilde + y) / (1.0 + rho2)
    np.testing.assert_allclose(np.asarray(out), np.asarray(ref),
                               rtol=1e-6, atol=1e-6)
    assert out.shape == v_tilde.shape and out.dtype == jnp.float32

    print("KERNEL_OK")
</pallas_src>

<mosaic_0001>
module attributes {stable_mosaic.version = 11 : i64} {
  func.func @_v_update_kernel(%arg0: i32, %arg1: memref<1xf32, #tpu.memory_space<smem>>, %arg2: memref<16x128xf32, #tpu.memory_space<vmem>>, %arg3: memref<16x128xf32, #tpu.memory_space<vmem>>, %arg4: memref<16x128xf32, #tpu.memory_space<vmem>>) attributes {dimension_semantics = [#tpu.dimension_semantics<parallel>], iteration_bounds = array<i64: 1>, scalar_prefetch = 0 : i64, scratch_operands = 0 : i64, tpu.core_type = #tpu.core_type<tc>, window_params = [{transform_indices = @transform_0, window_bounds = array<i64: 1>}, {transform_indices = @transform_1, window_bounds = array<i64: 16, 128>}, {transform_indices = @transform_2, window_bounds = array<i64: 16, 128>}, {transform_indices = @transform_3, window_bounds = array<i64: 16, 128>}]} {
    %c0 = arith.constant 0 : index
    %0 = memref.load %arg1[%c0] : memref<1xf32, #tpu.memory_space<smem>>
    %cst = arith.constant 1.000000e+00 : f32
    %1 = arith.addf %cst, %0 : f32
    %cst_0 = arith.constant 1.000000e+00 : f32
    %2 = arith.divf %cst_0, %1 : f32
    %c0_1 = arith.constant 0 : index
    %c0_2 = arith.constant 0 : index
    %3 = vector.load %arg2[%c0_1, %c0_2] : memref<16x128xf32, #tpu.memory_space<vmem>>, vector<16x128xf32>
    %4 = vector.broadcast %0 : f32 to vector<16x128xf32>
    %5 = arith.mulf %3, %4 : vector<16x128xf32>
    %c0_3 = arith.constant 0 : index
    %c0_4 = arith.constant 0 : index
    %6 = vector.load %arg3[%c0_3, %c0_4] : memref<16x128xf32, #tpu.memory_space<vmem>>, vector<16x128xf32>
    %7 = arith.addf %5, %6 : vector<16x128xf32>
    %8 = vector.broadcast %2 : f32 to vector<16x128xf32>
    %9 = arith.mulf %7, %8 : vector<16x128xf32>
    %c0_5 = arith.constant 0 : index
    %c0_6 = arith.constant 0 : index
    %10 = vector.load %arg4[%c0_5, %c0_6] : memref<16x128xf32, #tpu.memory_space<vmem>>, vector<16x128xf32>
    tpu.vector_store %arg4[%c0_5, %c0_6], %9 {strides = array<i32>} : memref<16x128xf32, #tpu.memory_space<vmem>>, vector<16x128xf32>,
    return
  }
  func.func @transform_0(%arg0: i32) -> i32 {
    %c0_i32 = arith.constant 0 : i32
    %c0_i32_0 = arith.constant 0 : i32
    return %c0_i32 : i32
  }
  func.func @transform_1(%arg0: i32) -> (i32, i32) {
    %c0_i32 = arith.constant 0 : i32
    %c0_i32_0 = arith.constant 0 : i32
    return %arg0, %c0_i32 : i32, i32
  }
  func.func @transform_2(%arg0: i32) -> (i32, i32) {
    %c0_i32 = arith.constant 0 : i32
    %c0_i32_0 = arith.constant 0 : i32
    return %arg0, %c0_i32 : i32, i32
  }
  func.func @transform_3(%arg0: i32) -> (i32, i32) {
    %c0_i32 = arith.constant 0 : i32
    %c0_i32_0 = arith.constant 0 : i32
    return %arg0, %c0_i32 : i32, i32
  }
}

</mosaic_0001>

<llo_original>
// kernel: v_update_gaussian.1
$region0: #{v_update_gaussian.1}
  #allocation0 [shape = 'u32[]', space=smem, size = 0x4, offset = 0x4, fixed_abs, tag = 'smem constant byte address 0x4 - core index']
  #allocation1 [shape = 'u32[144,128]{1,0:T(1,128)}', space=vmem, size = 0x12000, scoped, tag = 'internal scratch']
  #allocation2 [shape = 'f32[1]{0:T(128)S(6)}', space=smem, size = 0x200, scoped, tag = 'scoped memory for v_update_gaussian.1']
  %s0 = inlined_call_operand.<no memory space> [shape: f32[1], index: 0, kind: input, shape index: {}]
  %s1 = inlined_call_operand.vmem [shape: f32[16,128], index: 1, kind: input, shape index: {}]
  %s2 = inlined_call_operand.vmem [shape: f32[16,128], index: 2, kind: input, shape index: {}]
  %s3 = inlined_call_operand.vmem [shape: f32[16,128], index: 3, kind: output, shape index: {}]
  %s4 = sld [smem:[#allocation0]]
  $region22: #{v_update_gaussian.1} parent=0
    _
  %s6 = ssub.s32 1, %s4
  %s7 = scalar_select 0, %s6, %s4
  %8 = sst [smem:[#allocation2]] %s0
  // Predicated region
  $region2: #{v_update_gaussian.1} parent=0 // pred_check
    _
  $region3: #{v_update_gaussian.1} parent=0 // pred_check_branch
    %10 = sbr.rel (0) target = $region5
  $region4: #{v_update_gaussian.1} parent=0 // pred_region
    _
  $region5: #{v_update_gaussian.1} parent=0 // pred_fallthru
    _
  // Predicated region
  $region6: #{v_update_gaussian.1} parent=0 // pred_check
    _
  $region7: #{v_update_gaussian.1} parent=0 // pred_check_branch
    %12 = sbr.rel (0) target = $region9
  $region8: #{v_update_gaussian.1} parent=0 // pred_region
    _
  $region9: #{v_update_gaussian.1} parent=0 // pred_fallthru
    _
  // Predicated region
  $region10: #{v_update_gaussian.1} parent=0 // pred_check
    _
  $region11: #{v_update_gaussian.1} parent=0 // pred_check_branch
    %14 = sbr.rel (0) target = $region13
  $region12: #{v_update_gaussian.1} parent=0 // pred_region
    _
  $region13: #{v_update_gaussian.1} parent=0 // pred_fallthru
    _
  %s15 = sld [smem:[#allocation2]]
  %s16 = sadd.f32 %s15, 1.0
  %v17 = vstv %s16
  %v18 = vrcp.pop %v17
  %s19 = vtos %v18
  %v20 = vld [vmem:[%s1] sm:$0xff]
  %v21 = vld [vmem:[%s1 + $0x8] sm:$0xff]
  %v22 = vstv %s15
  %v23 = vmul.f32 %v20, %v22
  %v24 = vmul.f32 %v21, %v22
  %v25 = vld [vmem:[%s2] sm:$0xff]
  %v26 = vld [vmem:[%s2 + $0x8] sm:$0xff]
  %v27 = vadd.f32 %v23, %v25
  %v28 = vadd.f32 %v24, %v26
  %v29 = vstv %s19
  %v30 = vmul.f32 %v27, %v29
  %v31 = vmul.f32 %v28, %v29
  %32 = vst [vmem:[%s3] sm:$0xff] %v30
  %33 = vst [vmem:[%s3 + $0x8] sm:$0xff] %v31
  // Predicated region
  $region14: #{v_update_gaussian.1} parent=0 // pred_check
    _
  $region15: #{v_update_gaussian.1} parent=0 // pred_check_branch
    %35 = sbr.rel (0) target = $region17
  $region16: #{v_update_gaussian.1} parent=0 // pred_region
    _
  $region17: #{v_update_gaussian.1} parent=0 // pred_fallthru
    _
  // Predicated region
  $region18: #{v_update_gaussian.1} parent=0 // pred_check
    _
  $region19: #{v_update_gaussian.1} parent=0 // pred_check_branch
    %37 = sbr.rel (0) target = $region21
  $region20: #{v_update_gaussian.1} parent=0 // pred_region
    _
  $region21: #{v_update_gaussian.1} parent=0 // pred_fallthru
    _

</llo_original>
